<compile_context>
chip_gen: v7x
topology: tpu7x:2x2x1
jax: 0.10.0
libtpu: 0.0.40
codegen_flags: <defaults>
</compile_context>

<pallas_src>
import math

import jax
import jax.numpy as jnp
from jax.experimental import pallas as pl
from jax.experimental.pallas import tpu as pltpu


def _round_up(a: int, b: int) -> int:
    return ((a + b - 1) // b) * b


def _autoencoder_kernel(x_ref, we_ref, be_ref, wd_ref, bd_ref, o_ref):
    # x_ref : (TM, D)    f32 flattened input tile (bf16 cast happens here, in VMEM)
    # we_ref: (D, HIDp)  bf16 encoder weight (pre-transposed, HID zero-padded)
    # be_ref: (1, HIDp)  f32  encoder bias   (zero-padded)
    # wd_ref: (HIDp, D)  bf16 decoder weight (pre-transposed, HID zero-padded)
    # bd_ref: (1, D)     f32  decoder bias
    # o_ref : (TM, D)    reconstruction tile (f32 by default, optionally bf16)
    x = x_ref[...].astype(we_ref.dtype)               # free VPU work hidden under DMA
    # encode: Linear + ReLU (MXU matmul, f32 accumulation)
    h = jnp.dot(x, we_ref[...], preferred_element_type=jnp.float32)
    h = jnp.maximum(h + be_ref[...], 0.0)
    # decode: Linear (activations back to bf16 so the MXU stays bf16-native)
    y = jnp.dot(h.astype(wd_ref.dtype), wd_ref[...],
                preferred_element_type=jnp.float32) + bd_ref[...]
    o_ref[...] = y.astype(o_ref.dtype)


def prepare_params(w_enc, b_enc, w_dec, b_dec, *, compute_dtype=jnp.bfloat16):
    """One-time weight prep: transpose to x@W layout, zero-pad HID to a multiple
    of 128 (value-preserving: padded encoder columns AND decoder rows are zero
    and ReLU(0)=0), cast weights to bf16 once."""
    HID, D = w_enc.shape
    HIDp = _round_up(HID, 128)

    we = jnp.zeros((D, HIDp), compute_dtype)
    we = we.at[:, :HID].set(w_enc.T.astype(compute_dtype))      # (D, HIDp)
    be = jnp.zeros((1, HIDp), jnp.float32)
    be = be.at[0, :HID].set(b_enc.astype(jnp.float32))           # (1, HIDp)

    wd = jnp.zeros((HIDp, D), compute_dtype)
    wd = wd.at[:HID, :].set(w_dec.T.astype(compute_dtype))       # (HIDp, D)
    bd = b_dec.reshape(1, D).astype(jnp.float32)                 # (1, D)
    return we, be, wd, bd


def _choose_tile_m(n_rows: int, tm_max: int) -> int:
    """Batch tile: as big as allowed (bigger DMAs amortize the ~0.35us/step
    overhead), but ~half the batch so there are >=2 grid steps and v7x's two
    TensorCores both engage on the "parallel" axis (harmless on v5e/v6e).
    Multiple of 16 rows so sublanes stay fully packed even with bf16 tiles."""
    tm_max = max(16, _round_up(tm_max, 16))
    half = _round_up(pl.cdiv(max(n_rows, 1), 2), 16)
    return min(tm_max, half)


def autoencoder_forward(x_nchw, params, *, tm=1024, out_dtype=jnp.float32):
    """Fused encode->decode. x_nchw: (N, C, H, W) float32. params from
    prepare_params(). Pass out_dtype=jnp.bfloat16 to halve the output HBM
    stream if the consumer tolerates bf16 reconstructions."""
    we, be, wd, bd = params
    N, C, H, W = x_nchw.shape
    D = C * H * W
    HIDp = we.shape[1]
    assert we.shape == (D, HIDp) and wd.shape == (HIDp, D)

    # Metadata-only reshape; NO astype / pad here — the kernel reads f32
    # directly and casts in VMEM (saves a full extra HBM pass of the input).
    x2d = x_nchw.reshape(N, D)

    TM = _choose_tile_m(N, tm)
    grid = (pl.cdiv(N, TM),)          # ragged last block is masked by Pallas

    # VMEM budget: double-buffered x/out tiles + resident weight blocks +
    # headroom, capped at 40 MiB (v7x has only 64 MiB physical VMEM per TC).
    in_bytes = TM * D * jnp.dtype(x2d.dtype).itemsize
    out_bytes = TM * D * jnp.dtype(out_dtype).itemsize
    w_bytes = sum(int(a.size) * jnp.dtype(a.dtype).itemsize for a in (we, be, wd, bd))
    vmem_bytes = 2 * (in_bytes + out_bytes) + 2 * w_bytes + (4 << 20)
    vmem_bytes = int(min(max(vmem_bytes, 16 << 20), 40 << 20))

    # TODO(synk): if D grows large (>=16K), add a second grid axis tiling the
    # decoder output columns (wd (HIDp, TN), bd (1, TN), out (TM, TN)) and
    # single-buffer the resident weight blocks (pipeline_mode=pl.Buffered(1))
    # to keep VMEM bounded; full-D blocks + double-buffered ~0.5 MiB weights
    # are fine at D=1024.
    out2d = pl.pallas_call(
        _autoencoder_kernel,
        out_shape=jax.ShapeDtypeStruct((N, D), out_dtype),
        grid=grid,
        in_specs=[
            pl.BlockSpec((TM, D), lambda i: (i, 0)),      # x tile (pipelined)
            pl.BlockSpec((D, HIDp), lambda i: (0, 0)),    # encoder W (resident)
            pl.BlockSpec((1, HIDp), lambda i: (0, 0)),    # encoder b (resident)
            pl.BlockSpec((HIDp, D), lambda i: (0, 0)),    # decoder W (resident)
            pl.BlockSpec((1, D), lambda i: (0, 0)),       # decoder b (resident)
        ],
        out_specs=pl.BlockSpec((TM, D), lambda i: (i, 0)),
        compiler_params=pltpu.CompilerParams(
            dimension_semantics=("parallel",),            # megacore / 2 TCs on v7x
            vmem_limit_bytes=vmem_bytes,
        ),
    )(x2d, we, be, wd, bd)

    return out2d.reshape(N, C, H, W)


def _xavier_uniform(key, shape):
    # shape = (out_features, in_features), torch convention
    fan_out, fan_in = shape
    bound = math.sqrt(6.0 / (fan_in + fan_out))
    return jax.random.uniform(key, shape, jnp.float32, -bound, bound)


if __name__ == "__main__":
    # Deterministic setup
    key = jax.random.PRNGKey(0)
    k_x, k_we, k_wd = jax.random.split(key, 3)

    N, C, H, W = 2, 4, 16, 16
    D = C * H * W        # 1024
    HID = 32

    x = jax.random.normal(k_x, (N, C, H, W), dtype=jnp.float32)

    # init_weights(): Xavier-uniform Linear weights, zero biases.
    w_enc = _xavier_uniform(k_we, (HID, D))      # encoder Linear(D -> HID)
    b_enc = jnp.zeros((HID,), jnp.float32)
    w_dec = _xavier_uniform(k_wd, (D, HID))      # decoder Linear(HID -> D)
    b_dec = jnp.zeros((D,), jnp.float32)

    # One-time weight prep (transpose + HID pad + bf16 cast), then fused forward.
    params = prepare_params(w_enc, b_enc, w_dec, b_dec)
    out = autoencoder_forward(x, params)          # f32 output (module semantics)
    out = jax.block_until_ready(out)

    # Pure-JAX f32 reference of forward = decode(encode(x)).
    # bf16 MXU operands with f32 accumulation -> relaxed tolerance.
    h_ref = jnp.maximum(x.reshape(N, D) @ w_enc.T + b_enc, 0.0)
    y_ref = (h_ref @ w_dec.T + b_dec).reshape(N, C, H, W)
    assert out.shape == (N, C, H, W) and out.dtype == jnp.float32
    assert jnp.allclose(out, y_ref, atol=2e-2, rtol=2e-2)

    print("KERNEL_OK")
</pallas_src>

<mosaic_0001>
module attributes {stable_mosaic.version = 11 : i64} {
  func.func @_autoencoder_kernel(%arg0: i32, %arg1: memref<16x1024xf32, #tpu.memory_space<vmem>>, %arg2: memref<1024x128xbf16, #tpu.memory_space<vmem>>, %arg3: memref<1x128xf32, #tpu.memory_space<vmem>>, %arg4: memref<128x1024xbf16, #tpu.memory_space<vmem>>, %arg5: memref<1x1024xf32, #tpu.memory_space<vmem>>, %arg6: memref<16x1024xf32, #tpu.memory_space<vmem>>) attributes {dimension_semantics = [#tpu.dimension_semantics<parallel>], iteration_bounds = array<i64: 1>, scalar_prefetch = 0 : i64, scratch_operands = 0 : i64, tpu.core_type = #tpu.core_type<tc>, window_params = [{transform_indices = @transform_0, window_bounds = array<i64: 16, 1024>}, {pipeline_mode = #tpu.pipeline_mode<synchronous>, transform_indices = @transform_1, window_bounds = array<i64: 1024, 128>}, {pipeline_mode = #tpu.pipeline_mode<synchronous>, transform_indices = @transform_2, window_bounds = array<i64: 1, 128>}, {pipeline_mode = #tpu.pipeline_mode<synchronous>, transform_indices = @transform_3, window_bounds = array<i64: 128, 1024>}, {pipeline_mode = #tpu.pipeline_mode<synchronous>, transform_indices = @transform_4, window_bounds = array<i64: 1, 1024>}, {transform_indices = @transform_5, window_bounds = array<i64: 16, 1024>}]} {
    %c0 = arith.constant 0 : index
    %c0_0 = arith.constant 0 : index
    %0 = vector.load %arg1[%c0, %c0_0] : memref<16x1024xf32, #tpu.memory_space<vmem>>, vector<16x1024xf32>
    %1 = arith.truncf %0 : vector<16x1024xf32> to vector<16x1024xbf16>
    %c0_1 = arith.constant 0 : index
    %c0_2 = arith.constant 0 : index
    %2 = vector.load %arg2[%c0_1, %c0_2] : memref<1024x128xbf16, #tpu.memory_space<vmem>>, vector<1024x128xbf16>
    %cst = arith.constant dense<0.000000e+00> : vector<16x128xf32>
    %3 = tpu.matmul %1, %2, %cst {dimension_numbers = #tpu.dot_dimension_numbers<[1], [0], [0], [1], [0, 0, 1, 1], [], []>} : vector<16x1024xbf16>, vector<1024x128xbf16>, vector<16x128xf32> -> vector<16x128xf32>
    %c0_3 = arith.constant 0 : index
    %c0_4 = arith.constant 0 : index
    %4 = vector.load %arg3[%c0_3, %c0_4] : memref<1x128xf32, #tpu.memory_space<vmem>>, vector<1x128xf32>
    %5 = vector.broadcast %4 : vector<1x128xf32> to vector<16x128xf32>
    %6 = arith.addf %3, %5 : vector<16x128xf32>
    %cst_5 = arith.constant 0.000000e+00 : f32
    %7 = vector.broadcast %cst_5 : f32 to vector<16x128xf32>
    %8 = arith.maximumf %6, %7 : vector<16x128xf32>
    %9 = arith.truncf %8 : vector<16x128xf32> to vector<16x128xbf16>
    %c0_6 = arith.constant 0 : index
    %c0_7 = arith.constant 0 : index
    %10 = vector.load %arg4[%c0_6, %c0_7] : memref<128x1024xbf16, #tpu.memory_space<vmem>>, vector<128x1024xbf16>
    %cst_8 = arith.constant dense<0.000000e+00> : vector<16x1024xf32>
    %11 = tpu.matmul %9, %10, %cst_8 {dimension_numbers = #tpu.dot_dimension_numbers<[1], [0], [0], [1], [0, 0, 1, 1], [], []>} : vector<16x128xbf16>, vector<128x1024xbf16>, vector<16x1024xf32> -> vector<16x1024xf32>
    %c0_9 = arith.constant 0 : index
    %c0_10 = arith.constant 0 : index
    %12 = vector.load %arg5[%c0_9, %c0_10] : memref<1x1024xf32, #tpu.memory_space<vmem>>, vector<1x1024xf32>
    %13 = vector.broadcast %12 : vector<1x1024xf32> to vector<16x1024xf32>
    %14 = arith.addf %11, %13 : vector<16x1024xf32>
    %c0_11 = arith.constant 0 : index
    %c0_12 = arith.constant 0 : index
    %15 = vector.load %arg6[%c0_11, %c0_12] : memref<16x1024xf32, #tpu.memory_space<vmem>>, vector<16x1024xf32>
    tpu.vector_store %arg6[%c0_11, %c0_12], %14 {strides = array<i32>} : memref<16x1024xf32, #tpu.memory_space<vmem>>, vector<16x1024xf32>,
    return
  }
  func.func @transform_0(%arg0: i32) -> (i32, i32) {
    %c0_i32 = arith.constant 0 : i32
    %c0_i32_0 = arith.constant 0 : i32
    return %arg0, %c0_i32 : i32, i32
  }
  func.func @transform_1(%arg0: i32) -> (i32, i32) {
    %c0_i32 = arith.constant 0 : i32
    %c0_i32_0 = arith.constant 0 : i32
    %c0_i32_1 = arith.constant 0 : i32
    return %c0_i32, %c0_i32_0 : i32, i32
  }
  func.func @transform_2(%arg0: i32) -> (i32, i32) {
    %c0_i32 = arith.constant 0 : i32
    %c0_i32_0 = arith.constant 0 : i32
    %c0_i32_1 = arith.constant 0 : i32
    return %c0_i32, %c0_i32_0 : i32, i32
  }
  func.func @transform_3(%arg0: i32) -> (i32, i32) {
    %c0_i32 = arith.constant 0 : i32
    %c0_i32_0 = arith.constant 0 : i32
    %c0_i32_1 = arith.constant 0 : i32
    return %c0_i32, %c0_i32_0 : i32, i32
  }
  func.func @transform_4(%arg0: i32) -> (i32, i32) {
    %c0_i32 = arith.constant 0 : i32
    %c0_i32_0 = arith.constant 0 : i32
    %c0_i32_1 = arith.constant 0 : i32
    return %c0_i32, %c0_i32_0 : i32, i32
  }
  func.func @transform_5(%arg0: i32) -> (i32, i32) {
    %c0_i32 = arith.constant 0 : i32
    %c0_i32_0 = arith.constant 0 : i32
    return %arg0, %c0_i32 : i32, i32
  }
}

</mosaic_0001>

<llo_original>
// kernel: tpu_custom_call.1
$region0: #{tpu_custom_call.1}
  #allocation0 [shape = 'u32[]', space=smem, size = 0x4, offset = 0x4, fixed_abs, tag = 'smem constant byte address 0x4 - core index']
  #allocation1 [shape = 'u32[144,128]{1,0:T(1,128)}', space=vmem, size = 0x12000, scoped, tag = 'internal scratch']
  %s0 = inlined_call_operand.hbm [shape: f32[2,1024], index: 0, kind: input, shape index: {}]
  %s1 = inlined_call_operand.hbm [shape: bf16[1024,128], index: 1, kind: input, shape index: {}]
  %s2 = inlined_call_operand.vmem [shape: f32[1,128], index: 2, kind: input, shape index: {}]
  %s3 = inlined_call_operand.hbm [shape: bf16[128,1024], index: 3, kind: input, shape index: {}]
  %s4 = inlined_call_operand.vmem [shape: f32[1,1024], index: 4, kind: input, shape index: {}]
  %s5 = inlined_call_operand.hbm [shape: f32[2,1024], index: 5, kind: output, shape index: {}]
  %s6 = sld [smem:[#allocation0]]
  $region42: #{tpu_custom_call.1} parent=0
    _
  %s8 = ssub.s32 1, %s6
  %s9 = scalar_select 0, %s8, %s6
  $region1: #{tpu_custom_call.1} parent=0
    #allocation2 [shape = 'u8[65536]{0}', space=vmem, size = 0x10000, scoped, tag = 'input window, operand 0, single buffered']
    #allocation3 [shape = 's32[1]{0}', space=sflag, size = 0x4, scoped, tag = 'scoped memory for tpu_custom_call.1']
    #allocation4 [shape = 's32[1]{0}', space=sflag, size = 0x4, scoped, tag = 'scoped memory for tpu_custom_call.1']
    #allocation5 [shape = 'u8[262144]{0}', space=vmem, size = 0x40000, scoped, tag = 'input window, operand 1, single buffered']
    #allocation6 [shape = 's32[1]{0}', space=sflag, size = 0x4, scoped, tag = 'scoped memory for tpu_custom_call.1']
    #allocation7 [shape = 'u8[262144]{0}', space=vmem, size = 0x40000, scoped, tag = 'input window, operand 3, single buffered']
    #allocation8 [shape = 'u8[65536]{0}', space=vmem, size = 0x10000, scoped, tag = 'output window, operand 0, single buffered']
    %10 = vsyncpa [#allocation3], 0
    %11 = vsyncpa [#allocation6], 0
    %12 = vsyncpa [#allocation4], 0
    // Predicated region
    $region2: #{tpu_custom_call.1} parent=1 // pred_check
      _
    $region3: #{tpu_custom_call.1} parent=1 // pred_check_branch
      %14 = sbr.rel (0) target = $region5
    $region4: #{tpu_custom_call.1} parent=1 // pred_region
      %s16 = ssub.s32 2048, 256
      %17 = vsyncadd [#allocation3], %s16
      %s18 = sshll.u32 [#allocation2], 4
      %s19 = int_to_ptr.vmem [resolvable:$true] %s18
      %24 = dma.hbm_to_vmem [thread:$0]  %s0, 256, %s19, [#allocation3], 256, 256, 16
    $region5: #{tpu_custom_call.1} parent=1 // pred_fallthru
      _
    // Predicated region
    $region6: #{tpu_custom_call.1} parent=1 // pred_check
      _
    $region7: #{tpu_custom_call.1} parent=1 // pred_check_branch
      %26 = sbr.rel (0) target = $region9
    $region8: #{tpu_custom_call.1} parent=1 // pred_region
      %s28 = ssub.s32 8192, 8192
      %29 = vsyncadd [#allocation6], %s28
      %s30 = sshll.u32 [#allocation5], 4
      %s31 = int_to_ptr.vmem [resolvable:$true] %s30
      %36 = dma.hbm_to_vmem [thread:$0]  %s1, 8192, %s31, [#allocation6], 64, 64, 4
    $region9: #{tpu_custom_call.1} parent=1 // pred_fallthru
      _
    // Predicated region
    $region10: #{tpu_custom_call.1} parent=1 // pred_check
      _
    $region11: #{tpu_custom_call.1} parent=1 // pred_check_branch
      %38 = sbr.rel (0) target = $region13
    $region12: #{tpu_custom_call.1} parent=1 // pred_region
      _
    $region13: #{tpu_custom_call.1} parent=1 // pred_fallthru
      _
    // Predicated region
    $region14: #{tpu_custom_call.1} parent=1 // pred_check
      _
    $region15: #{tpu_custom_call.1} parent=1 // pred_check_branch
      %40 = sbr.rel (0) target = $region17
    $region16: #{tpu_custom_call.1} parent=1 // pred_region
      %s42 = ssub.s32 8192, 8192
      %43 = vsyncadd [#allocation6], %s42
      %s44 = sshll.u32 [#allocation7], 4
      %s45 = int_to_ptr.vmem [resolvable:$true] %s44
      %50 = dma.hbm_to_vmem [thread:$0]  %s3, 8192, %s45, [#allocation6], 512, 512, 32
    $region17: #{tpu_custom_call.1} parent=1 // pred_fallthru
      _
    // Predicated region
    $region18: #{tpu_custom_call.1} parent=1 // pred_check
      _
    $region19: #{tpu_custom_call.1} parent=1 // pred_check_branch
      %52 = sbr.rel (0) target = $region21
    $region20: #{tpu_custom_call.1} parent=1 // pred_region
      _
    $region21: #{tpu_custom_call.1} parent=1 // pred_fallthru
      _
    // Predicated region
    $region22: #{tpu_custom_call.1} parent=1 // pred_check
      _
    $region23: #{tpu_custom_call.1} parent=1 // pred_check_branch
      %54 = sbr.rel (0) target = $region25
    $region24: #{tpu_custom_call.1} parent=1 // pred_region
      %55 = dma.done [#allocation3], 2048
    $region25: #{tpu_custom_call.1} parent=1 // pred_fallthru
      _
    // Predicated region
    $region26: #{tpu_custom_call.1} parent=1 // pred_check
      _
    $region27: #{tpu_custom_call.1} parent=1 // pred_check_branch
      %57 = sbr.rel (0) target = $region29
    $region28: #{tpu_custom_call.1} parent=1 // pred_region
      %58 = dma.done [#allocation6], 8192
    $region29: #{tpu_custom_call.1} parent=1 // pred_fallthru
      _
    // Predicated region
    $region30: #{tpu_custom_call.1} parent=1 // pred_check
      _
    $region31: #{tpu_custom_call.1} parent=1 // pred_check_branch
      %60 = sbr.rel (0) target = $region33
    $region32: #{tpu_custom_call.1} parent=1 // pred_region
      %61 = dma.done [#allocation6], 8192
    $region33: #{tpu_custom_call.1} parent=1 // pred_fallthru
      _
    %v63 = vld [vmem:[#allocation2] sm:$0xff]
    %v64 = vld [vmem:[#allocation2 + $0x8] sm:$0xff]
    %v65 = vld [vmem:[#allocation2 + $0x10] sm:$0xff]
    %v66 = vld [vmem:[#allocation2 + $0x18] sm:$0xff]
    %v67 = vld [vmem:[#allocation2 + $0x20] sm:$0xff]
    %v68 = vld [vmem:[#allocation2 + $0x28] sm:$0xff]
    %v69 = vld [vmem:[#allocation2 + $0x30] sm:$0xff]
    %v70 = vld [vmem:[#allocation2 + $0x38] sm:$0xff]
    %v71 = vld [vmem:[#allocation2 + $0x40] sm:$0xff]
    %v72 = vld [vmem:[#allocation2 + $0x48] sm:$0xff]
    %v73 = vld [vmem:[#allocation2 + $0x50] sm:$0xff]
    %v74 = vld [vmem:[#allocation2 + $0x58] sm:$0xff]
    %v75 = vld [vmem:[#allocation2 + $0x60] sm:$0xff]
    %v76 = vld [vmem:[#allocation2 + $0x68] sm:$0xff]
    %v77 = vld [vmem:[#allocation2 + $0x70] sm:$0xff]
    %v78 = vld [vmem:[#allocation2 + $0x78] sm:$0xff]
    %v95 = vcombine.low %v63, %v65
    %v96 = vcombine.high %v63, %v65
    %v97 = vcombine.low %v67, %v69
    %v98 = vcombine.high %v67, %v69
    %v100 = vunpack.c.l.s4 1983009808
    %v101 = vunpack.c.0.s8 %v100
    %v102 = vlaneseq
    %v103 = vshrl.u32 %v102, 7
    %v104 = vsub.s32 %v101, %v103
    %v105 = vrot.slane %v95, %v104
    %v107 = vunpack.c.l.s4 1983009808
    %v108 = vunpack.c.0.s8 %v107
    %v109 = vlaneseq
    %v110 = vshrl.u32 %v109, 7
    %v111 = vsub.s32 %v108, %v110
    %v112 = vrot.slane %v96, %v111
    %v114 = vunpack.c.l.s4 1983009808
    %v115 = vunpack.c.0.s8 %v114
    %v116 = vlaneseq
    %v117 = vshrl.u32 %v116, 7
    %v118 = vsub.s32 %v115, %v117
    %v119 = vrot.slane %v97, %v118
    %v121 = vunpack.c.l.s4 1983009808
    %v122 = vunpack.c.0.s8 %v121
    %v123 = vlaneseq
    %v124 = vshrl.u32 %v123, 7
    %v125 = vsub.s32 %v122, %v124
    %v126 = vrot.slane %v98, %v125
    %v127 = vcombine.low %v105, %v119
    %v128 = vcombine.high %v105, %v119
    %v129 = vcombine.low %v112, %v126
    %v130 = vcombine.high %v112, %v126
    %v131 = vcombine.low %v64, %v66
    %v132 = vcombine.high %v64, %v66
    %v133 = vcombine.low %v68, %v70
    %v134 = vcombine.high %v68, %v70
    %v136 = vunpack.c.l.s4 1983009808
    %v137 = vunpack.c.0.s8 %v136
    %v138 = vlaneseq
    %v139 = vshrl.u32 %v138, 7
    %v140 = vsub.s32 %v137, %v139
    %v141 = vrot.slane %v131, %v140
    %v143 = vunpack.c.l.s4 1983009808
    %v144 = vunpack.c.0.s8 %v143
    %v145 = vlaneseq
    %v146 = vshrl.u32 %v145, 7
    %v147 = vsub.s32 %v144, %v146
    %v148 = vrot.slane %v132, %v147
    %v150 = vunpack.c.l.s4 1983009808
    %v151 = vunpack.c.0.s8 %v150
    %v152 = vlaneseq
    %v153 = vshrl.u32 %v152, 7
    %v154 = vsub.s32 %v151, %v153
    %v155 = vrot.slane %v133, %v154
    %v157 = vunpack.c.l.s4 1983009808
    %v158 = vunpack.c.0.s8 %v157
    %v159 = vlaneseq
    %v160 = vshrl.u32 %v159, 7
    %v161 = vsub.s32 %v158, %v160
    %v162 = vrot.slane %v134, %v161
    %v163 = vcombine.low %v141, %v155
    %v164 = vcombine.high %v141, %v155
    %v165 = vcombine.low %v148, %v162
    %v166 = vcombine.high %v148, %v162
    %v167 = vcombine.low %v71, %v73
    %v168 = vcombine.high %v71, %v73
    %v169 = vcombine.low %v75, %v77
    %v170 = vcombine.high %v75, %v77
    %v172 = vunpack.c.l.s4 1983009808
    %v173 = vunpack.c.0.s8 %v172
    %v174 = vlaneseq
    %v175 = vshrl.u32 %v174, 7
    %v176 = vsub.s32 %v173, %v175
    %v177 = vrot.slane %v167, %v176
    %v179 = vunpack.c.l.s4 1983009808
    %v180 = vunpack.c.0.s8 %v179
    %v181 = vlaneseq
    %v182 = vshrl.u32 %v181, 7
    %v183 = vsub.s32 %v180, %v182
    %v184 = vrot.slane %v168, %v183
    %v186 = vunpack.c.l.s4 1983009808
    %v187 = vunpack.c.0.s8 %v186
    %v188 = vlaneseq
    %v189 = vshrl.u32 %v188, 7
    %v190 = vsub.s32 %v187, %v189
    %v191 = vrot.slane %v169, %v190
    %v193 = vunpack.c.l.s4 1983009808
    %v194 = vunpack.c.0.s8 %v193
    %v195 = vlaneseq
    %v196 = vshrl.u32 %v195, 7
    %v197 = vsub.s32 %v194, %v196
    %v198 = vrot.slane %v170, %v197
    %v199 = vcombine.low %v177, %v191
    %v200 = vcombine.high %v177, %v191
    %v201 = vcombine.low %v184, %v198
    %v202 = vcombine.high %v184, %v198
    %v203 = vcombine.low %v72, %v74
    %v204 = vcombine.high %v72, %v74
    %v205 = vcombine.low %v76, %v78
    %v206 = vcombine.high %v76, %v78
    %v208 = vunpack.c.l.s4 1983009808
    %v209 = vunpack.c.0.s8 %v208
    %v210 = vlaneseq
    %v211 = vshrl.u32 %v210, 7
    %v212 = vsub.s32 %v209, %v211
    %v213 = vrot.slane %v203, %v212
    %v215 = vunpack.c.l.s4 1983009808
    %v216 = vunpack.c.0.s8 %v215
    %v217 = vlaneseq
    %v218 = vshrl.u32 %v217, 7
    %v219 = vsub.s32 %v216, %v218
    %v220 = vrot.slane %v204, %v219
    %v222 = vunpack.c.l.s4 1983009808
    %v223 = vunpack.c.0.s8 %v222
    %v224 = vlaneseq
    %v225 = vshrl.u32 %v224, 7
    %v226 = vsub.s32 %v223, %v225
    %v227 = vrot.slane %v205, %v226
    %v229 = vunpack.c.l.s4 1983009808
    %v230 = vunpack.c.0.s8 %v229
    %v231 = vlaneseq
    %v232 = vshrl.u32 %v231, 7
    %v233 = vsub.s32 %v230, %v232
    %v234 = vrot.slane %v206, %v233
    %v235 = vcombine.low %v213, %v227
    %v236 = vcombine.high %v213, %v227
    %v237 = vcombine.low %v220, %v234
    %v238 = vcombine.high %v220, %v234
    %v255 = vpack.c.bf16 %v199, %v127
    %v256 = vpack.c.bf16 %v200, %v128
    %v257 = vpack.c.bf16 %v201, %v129
    %v258 = vpack.c.bf16 %v202, %v130
    %v259 = vpack.c.bf16 %v235, %v163
    %v260 = vpack.c.bf16 %v236, %v164
    %v261 = vpack.c.bf16 %v237, %v165
    %v262 = vpack.c.bf16 %v238, %v166
    %v263 = vld [vmem:[#allocation5] sm:$0xf]
    %v264 = vld [vmem:[#allocation5 + $0x4] sm:$0xf]
    %v265 = vld [vmem:[#allocation5 + $0x8] sm:$0xf]
    %v266 = vld [vmem:[#allocation5 + $0xc] sm:$0xf]
    %v267 = vld [vmem:[#allocation5 + $0x10] sm:$0xf]
    %v268 = vld [vmem:[#allocation5 + $0x14] sm:$0xf]
    %v269 = vld [vmem:[#allocation5 + $0x18] sm:$0xf]
    %v270 = vld [vmem:[#allocation5 + $0x1c] sm:$0xf]
    %v271 = vld [vmem:[#allocation5 + $0x20] sm:$0xf]
    %v272 = vld [vmem:[#allocation5 + $0x24] sm:$0xf]
    %v273 = vld [vmem:[#allocation5 + $0x28] sm:$0xf]
    %v274 = vld [vmem:[#allocation5 + $0x2c] sm:$0xf]
    %v275 = vld [vmem:[#allocation5 + $0x30] sm:$0xf]
    %v276 = vld [vmem:[#allocation5 + $0x34] sm:$0xf]
    %v277 = vld [vmem:[#allocation5 + $0x38] sm:$0xf]
    %v278 = vld [vmem:[#allocation5 + $0x3c] sm:$0xf]
    %v279 = vld [vmem:[#allocation5 + $0x40] sm:$0xf]
    %v280 = vld [vmem:[#allocation5 + $0x44] sm:$0xf]
    %v281 = vld [vmem:[#allocation5 + $0x48] sm:$0xf]
    %v282 = vld [vmem:[#allocation5 + $0x4c] sm:$0xf]
    %v283 = vld [vmem:[#allocation5 + $0x50] sm:$0xf]
    %v284 = vld [vmem:[#allocation5 + $0x54] sm:$0xf]
    %v285 = vld [vmem:[#allocation5 + $0x58] sm:$0xf]
    %v286 = vld [vmem:[#allocation5 + $0x5c] sm:$0xf]
    %v287 = vld [vmem:[#allocation5 + $0x60] sm:$0xf]
    %v288 = vld [vmem:[#allocation5 + $0x64] sm:$0xf]
    %v289 = vld [vmem:[#allocation5 + $0x68] sm:$0xf]
    %v290 = vld [vmem:[#allocation5 + $0x6c] sm:$0xf]
    %v291 = vld [vmem:[#allocation5 + $0x70] sm:$0xf]
    %v292 = vld [vmem:[#allocation5 + $0x74] sm:$0xf]
    %v293 = vld [vmem:[#allocation5 + $0x78] sm:$0xf]
    %v294 = vld [vmem:[#allocation5 + $0x7c] sm:$0xf]
    %v295 = vld [vmem:[#allocation5 + $0x80] sm:$0xf]
    %v296 = vld [vmem:[#allocation5 + $0x84] sm:$0xf]
    %v297 = vld [vmem:[#allocation5 + $0x88] sm:$0xf]
    %v298 = vld [vmem:[#allocation5 + $0x8c] sm:$0xf]
    %v299 = vld [vmem:[#allocation5 + $0x90] sm:$0xf]
    %v300 = vld [vmem:[#allocation5 + $0x94] sm:$0xf]
    %v301 = vld [vmem:[#allocation5 + $0x98] sm:$0xf]
    %v302 = vld [vmem:[#allocation5 + $0x9c] sm:$0xf]
    %v303 = vld [vmem:[#allocation5 + $0xa0] sm:$0xf]
    %v304 = vld [vmem:[#allocation5 + $0xa4] sm:$0xf]
    %v305 = vld [vmem:[#allocation5 + $0xa8] sm:$0xf]
    %v306 = vld [vmem:[#allocation5 + $0xac] sm:$0xf]
    %v307 = vld [vmem:[#allocation5 + $0xb0] sm:$0xf]
    %v308 = vld [vmem:[#allocation5 + $0xb4] sm:$0xf]
    %v309 = vld [vmem:[#allocation5 + $0xb8] sm:$0xf]
    %v310 = vld [vmem:[#allocation5 + $0xbc] sm:$0xf]
    %v311 = vld [vmem:[#allocation5 + $0xc0] sm:$0xf]
    %v312 = vld [vmem:[#allocation5 + $0xc4] sm:$0xf]
    %v313 = vld [vmem:[#allocation5 + $0xc8] sm:$0xf]
    %v314 = vld [vmem:[#allocation5 + $0xcc] sm:$0xf]
    %v315 = vld [vmem:[#allocation5 + $0xd0] sm:$0xf]
    %v316 = vld [vmem:[#allocation5 + $0xd4] sm:$0xf]
    %v317 = vld [vmem:[#allocation5 + $0xd8] sm:$0xf]
    %v318 = vld [vmem:[#allocation5 + $0xdc] sm:$0xf]
    %v319 = vld [vmem:[#allocation5 + $0xe0] sm:$0xf]
    %v320 = vld [vmem:[#allocation5 + $0xe4] sm:$0xf]
    %v321 = vld [vmem:[#allocation5 + $0xe8] sm:$0xf]
    %v322 = vld [vmem:[#allocation5 + $0xec] sm:$0xf]
    %v323 = vld [vmem:[#allocation5 + $0xf0] sm:$0xf]
    %v324 = vld [vmem:[#allocation5 + $0xf4] sm:$0xf]
    %v325 = vld [vmem:[#allocation5 + $0xf8] sm:$0xf]
    %v326 = vld [vmem:[#allocation5 + $0xfc] sm:$0xf]
    %v327 = vld [vmem:[#allocation5 + $0x100] sm:$0xf]
    %v328 = vld [vmem:[#allocation5 + $0x104] sm:$0xf]
    %v329 = vld [vmem:[#allocation5 + $0x108] sm:$0xf]
    %v330 = vld [vmem:[#allocation5 + $0x10c] sm:$0xf]
    %v331 = vld [vmem:[#allocation5 + $0x110] sm:$0xf]
    %v332 = vld [vmem:[#allocation5 + $0x114] sm:$0xf]
    %v333 = vld [vmem:[#allocation5 + $0x118] sm:$0xf]
    %v334 = vld [vmem:[#allocation5 + $0x11c] sm:$0xf]
    %v335 = vld [vmem:[#allocation5 + $0x120] sm:$0xf]
    %v336 = vld [vmem:[#allocation5 + $0x124] sm:$0xf]
    %v337 = vld [vmem:[#allocation5 + $0x128] sm:$0xf]
    %v338 = vld [vmem:[#allocation5 + $0x12c] sm:$0xf]
    %v339 = vld [vmem:[#allocation5 + $0x130] sm:$0xf]
    %v340 = vld [vmem:[#allocation5 + $0x134] sm:$0xf]
    %v341 = vld [vmem:[#allocation5 + $0x138] sm:$0xf]
    %v342 = vld [vmem:[#allocation5 + $0x13c] sm:$0xf]
    %v343 = vld [vmem:[#allocation5 + $0x140] sm:$0xf]
    %v344 = vld [vmem:[#allocation5 + $0x144] sm:$0xf]
    %v345 = vld [vmem:[#allocation5 + $0x148] sm:$0xf]
    %v346 = vld [vmem:[#allocation5 + $0x14c] sm:$0xf]
    %v347 = vld [vmem:[#allocation5 + $0x150] sm:$0xf]
    %v348 = vld [vmem:[#allocation5 + $0x154] sm:$0xf]
    %v349 = vld [vmem:[#allocation5 + $0x158] sm:$0xf]
    %v350 = vld [vmem:[#allocation5 + $0x15c] sm:$0xf]
    %v351 = vld [vmem:[#allocation5 + $0x160] sm:$0xf]
    %v352 = vld [vmem:[#allocation5 + $0x164] sm:$0xf]
    %v353 = vld [vmem:[#allocation5 + $0x168] sm:$0xf]
    %v354 = vld [vmem:[#allocation5 + $0x16c] sm:$0xf]
    %v355 = vld [vmem:[#allocation5 + $0x170] sm:$0xf]
    %v356 = vld [vmem:[#allocation5 + $0x174] sm:$0xf]
    %v357 = vld [vmem:[#allocation5 + $0x178] sm:$0xf]
    %v358 = vld [vmem:[#allocation5 + $0x17c] sm:$0xf]
    %v359 = vld [vmem:[#allocation5 + $0x180] sm:$0xf]
    %v360 = vld [vmem:[#allocation5 + $0x184] sm:$0xf]
    %v361 = vld [vmem:[#allocation5 + $0x188] sm:$0xf]
    %v362 = vld [vmem:[#allocation5 + $0x18c] sm:$0xf]
    %v363 = vld [vmem:[#allocation5 + $0x190] sm:$0xf]
    %v364 = vld [vmem:[#allocation5 + $0x194] sm:$0xf]
    %v365 = vld [vmem:[#allocation5 + $0x198] sm:$0xf]
    %v366 = vld [vmem:[#allocation5 + $0x19c] sm:$0xf]
    %v367 = vld [vmem:[#allocation5 + $0x1a0] sm:$0xf]
    %v368 = vld [vmem:[#allocation5 + $0x1a4] sm:$0xf]
    %v369 = vld [vmem:[#allocation5 + $0x1a8] sm:$0xf]
    %v370 = vld [vmem:[#allocation5 + $0x1ac] sm:$0xf]
    %v371 = vld [vmem:[#allocation5 + $0x1b0] sm:$0xf]
    %v372 = vld [vmem:[#allocation5 + $0x1b4] sm:$0xf]
    %v373 = vld [vmem:[#allocation5 + $0x1b8] sm:$0xf]
    %v374 = vld [vmem:[#allocation5 + $0x1bc] sm:$0xf]
    %v375 = vld [vmem:[#allocation5 + $0x1c0] sm:$0xf]
    %v376 = vld [vmem:[#allocation5 + $0x1c4] sm:$0xf]
    %v377 = vld [vmem:[#allocation5 + $0x1c8] sm:$0xf]
    %v378 = vld [vmem:[#allocation5 + $0x1cc] sm:$0xf]
    %v379 = vld [vmem:[#allocation5 + $0x1d0] sm:$0xf]
    %v380 = vld [vmem:[#allocation5 + $0x1d4] sm:$0xf]
    %v381 = vld [vmem:[#allocation5 + $0x1d8] sm:$0xf]
    %v382 = vld [vmem:[#allocation5 + $0x1dc] sm:$0xf]
    %v383 = vld [vmem:[#allocation5 + $0x1e0] sm:$0xf]
    %v384 = vld [vmem:[#allocation5 + $0x1e4] sm:$0xf]
    %v385 = vld [vmem:[#allocation5 + $0x1e8] sm:$0xf]
    %v386 = vld [vmem:[#allocation5 + $0x1ec] sm:$0xf]
    %v387 = vld [vmem:[#allocation5 + $0x1f0] sm:$0xf]
    %v388 = vld [vmem:[#allocation5 + $0x1f4] sm:$0xf]
    %v389 = vld [vmem:[#allocation5 + $0x1f8] sm:$0xf]
    %v390 = vld [vmem:[#allocation5 + $0x1fc] sm:$0xf]
    %v391 = vld [vmem:[%s2] sm:$0x1]
    %v393 = vlaneseq
    %v394 = vshrl.u32 %v393, 7
    %v395 = vsub.s32 0, %v394
    %v396 = vrot.slane %v391, %v395
    %v526 = vunpack.c.l.b16 %v263
    %v527 = vunpack.c.l.b16 %v264
    %v528 = vunpack.c.l.b16 %v265
    %v529 = vunpack.c.l.b16 %v266
    %v530 = vunpack.c.l.b16 %v267
    %v531 = vunpack.c.l.b16 %v268
    %v532 = vunpack.c.l.b16 %v269
    %v533 = vunpack.c.l.b16 %v270
    %v534 = vunpack.c.l.b16 %v271
    %v535 = vunpack.c.l.b16 %v272
    %v536 = vunpack.c.l.b16 %v273
    %v537 = vunpack.c.l.b16 %v274
    %v538 = vunpack.c.l.b16 %v275
    %v539 = vunpack.c.l.b16 %v276
    %v540 = vunpack.c.l.b16 %v277
    %v541 = vunpack.c.l.b16 %v278
    %v542 = vunpack.c.l.b16 %v279
    %v543 = vunpack.c.l.b16 %v280
    %v544 = vunpack.c.l.b16 %v281
    %v545 = vunpack.c.l.b16 %v282
    %v546 = vunpack.c.l.b16 %v283
    %v547 = vunpack.c.l.b16 %v284
    %v548 = vunpack.c.l.b16 %v285
    %v549 = vunpack.c.l.b16 %v286
    %v550 = vunpack.c.l.b16 %v287
    %v551 = vunpack.c.l.b16 %v288
    %v552 = vunpack.c.l.b16 %v289
    %v553 = vunpack.c.l.b16 %v290
    %v554 = vunpack.c.l.b16 %v291
    %v555 = vunpack.c.l.b16 %v292
    %v556 = vunpack.c.l.b16 %v293
    %v557 = vunpack.c.l.b16 %v294
    %v558 = vunpack.c.l.b16 %v295
    %v559 = vunpack.c.l.b16 %v296
    %v560 = vunpack.c.l.b16 %v297
    %v561 = vunpack.c.l.b16 %v298
    %v562 = vunpack.c.l.b16 %v299
    %v563 = vunpack.c.l.b16 %v300
    %v564 = vunpack.c.l.b16 %v301
    %v565 = vunpack.c.l.b16 %v302
    %v566 = vunpack.c.l.b16 %v303
    %v567 = vunpack.c.l.b16 %v304
    %v568 = vunpack.c.l.b16 %v305
    %v569 = vunpack.c.l.b16 %v306
    %v570 = vunpack.c.l.b16 %v307
    %v571 = vunpack.c.l.b16 %v308
    %v572 = vunpack.c.l.b16 %v309
    %v573 = vunpack.c.l.b16 %v310
    %v574 = vunpack.c.l.b16 %v311
    %v575 = vunpack.c.l.b16 %v312
    %v576 = vunpack.c.l.b16 %v313
    %v577 = vunpack.c.l.b16 %v314
    %v578 = vunpack.c.l.b16 %v315
    %v579 = vunpack.c.l.b16 %v316
    %v580 = vunpack.c.l.b16 %v317
    %v581 = vunpack.c.l.b16 %v318
    %v582 = vunpack.c.l.b16 %v319
    %v583 = vunpack.c.l.b16 %v320
    %v584 = vunpack.c.l.b16 %v321
    %v585 = vunpack.c.l.b16 %v322
    %v586 = vunpack.c.l.b16 %v323
    %v587 = vunpack.c.l.b16 %v324
    %v588 = vunpack.c.l.b16 %v325
    %v589 = vunpack.c.l.b16 %v326
    %v590 = vunpack.c.l.b16 %v327
    %v591 = vunpack.c.l.b16 %v328
    %v592 = vunpack.c.l.b16 %v329
    %v593 = vunpack.c.l.b16 %v330
    %v594 = vunpack.c.l.b16 %v331
    %v595 = vunpack.c.l.b16 %v332
    %v596 = vunpack.c.l.b16 %v333
    %v597 = vunpack.c.l.b16 %v334
    %v598 = vunpack.c.l.b16 %v335
    %v599 = vunpack.c.l.b16 %v336
    %v600 = vunpack.c.l.b16 %v337
    %v601 = vunpack.c.l.b16 %v338
    %v602 = vunpack.c.l.b16 %v339
    %v603 = vunpack.c.l.b16 %v340
    %v604 = vunpack.c.l.b16 %v341
    %v605 = vunpack.c.l.b16 %v342
    %v606 = vunpack.c.l.b16 %v343
    %v607 = vunpack.c.l.b16 %v344
    %v608 = vunpack.c.l.b16 %v345
    %v609 = vunpack.c.l.b16 %v346
    %v610 = vunpack.c.l.b16 %v347
    %v611 = vunpack.c.l.b16 %v348
    %v612 = vunpack.c.l.b16 %v349
    %v613 = vunpack.c.l.b16 %v350
    %v614 = vunpack.c.l.b16 %v351
    %v615 = vunpack.c.l.b16 %v352
    %v616 = vunpack.c.l.b16 %v353
    %v617 = vunpack.c.l.b16 %v354
    %v618 = vunpack.c.l.b16 %v355
    %v619 = vunpack.c.l.b16 %v356
    %v620 = vunpack.c.l.b16 %v357
    %v621 = vunpack.c.l.b16 %v358
    %v622 = vunpack.c.l.b16 %v359
    %v623 = vunpack.c.l.b16 %v360
    %v624 = vunpack.c.l.b16 %v361
    %v625 = vunpack.c.l.b16 %v362
    %v626 = vunpack.c.l.b16 %v363
    %v627 = vunpack.c.l.b16 %v364
    %v628 = vunpack.c.l.b16 %v365
    %v629 = vunpack.c.l.b16 %v366
    %v630 = vunpack.c.l.b16 %v367
    %v631 = vunpack.c.l.b16 %v368
    %v632 = vunpack.c.l.b16 %v369
    %v633 = vunpack.c.l.b16 %v370
    %v634 = vunpack.c.l.b16 %v371
    %v635 = vunpack.c.l.b16 %v372
    %v636 = vunpack.c.l.b16 %v373
    %v637 = vunpack.c.l.b16 %v374
    %v638 = vunpack.c.l.b16 %v375
    %v639 = vunpack.c.l.b16 %v376
    %v640 = vunpack.c.l.b16 %v377
    %v641 = vunpack.c.l.b16 %v378
    %v642 = vunpack.c.l.b16 %v379
    %v643 = vunpack.c.l.b16 %v380
    %v644 = vunpack.c.l.b16 %v381
    %v645 = vunpack.c.l.b16 %v382
    %v646 = vunpack.c.l.b16 %v383
    %v647 = vunpack.c.l.b16 %v384
    %v648 = vunpack.c.l.b16 %v385
    %v649 = vunpack.c.l.b16 %v386
    %v650 = vunpack.c.l.b16 %v387
    %v651 = vunpack.c.l.b16 %v388
    %v652 = vunpack.c.l.b16 %v389
    %v653 = vunpack.c.l.b16 %v390
    %v654 = vpack.c.b16 %v527, %v526
    %v655 = vpack.c.b16 %v529, %v528
    %v656 = vpack.c.b16 %v531, %v530
    %v657 = vpack.c.b16 %v533, %v532
    %v658 = vpack.c.b16 %v535, %v534
    %v659 = vpack.c.b16 %v537, %v536
    %v660 = vpack.c.b16 %v539, %v538
    %v661 = vpack.c.b16 %v541, %v540
    %v662 = vpack.c.b16 %v543, %v542
    %v663 = vpack.c.b16 %v545, %v544
    %v664 = vpack.c.b16 %v547, %v546
    %v665 = vpack.c.b16 %v549, %v548
    %v666 = vpack.c.b16 %v551, %v550
    %v667 = vpack.c.b16 %v553, %v552
    %v668 = vpack.c.b16 %v555, %v554
    %v669 = vpack.c.b16 %v557, %v556
    %v670 = vpack.c.b16 %v559, %v558
    %v671 = vpack.c.b16 %v561, %v560
    %v672 = vpack.c.b16 %v563, %v562
    %v673 = vpack.c.b16 %v565, %v564
    %v674 = vpack.c.b16 %v567, %v566
    %v675 = vpack.c.b16 %v569, %v568
    %v676 = vpack.c.b16 %v571, %v570
    %v677 = vpack.c.b16 %v573, %v572
    %v678 = vpack.c.b16 %v575, %v574
    %v679 = vpack.c.b16 %v577, %v576
    %v680 = vpack.c.b16 %v579, %v578
    %v681 = vpack.c.b16 %v581, %v580
    %v682 = vpack.c.b16 %v583, %v582
    %v683 = vpack.c.b16 %v585, %v584
    %v684 = vpack.c.b16 %v587, %v586
    %v685 = vpack.c.b16 %v589, %v588
    %v686 = vpack.c.b16 %v591, %v590
    %v687 = vpack.c.b16 %v593, %v592
    %v688 = vpack.c.b16 %v595, %v594
    %v689 = vpack.c.b16 %v597, %v596
    %v690 = vpack.c.b16 %v599, %v598
    %v691 = vpack.c.b16 %v601, %v600
    %v692 = vpack.c.b16 %v603, %v602
    %v693 = vpack.c.b16 %v605, %v604
    %v694 = vpack.c.b16 %v607, %v606
    %v695 = vpack.c.b16 %v609, %v608
    %v696 = vpack.c.b16 %v611, %v610
    %v697 = vpack.c.b16 %v613, %v612
    %v698 = vpack.c.b16 %v615, %v614
    %v699 = vpack.c.b16 %v617, %v616
    %v700 = vpack.c.b16 %v619, %v618
    %v701 = vpack.c.b16 %v621, %v620
    %v702 = vpack.c.b16 %v623, %v622
    %v703 = vpack.c.b16 %v625, %v624
    %v704 = vpack.c.b16 %v627, %v626
    %v705 = vpack.c.b16 %v629, %v628
    %v706 = vpack.c.b16 %v631, %v630
    %v707 = vpack.c.b16 %v633, %v632
    %v708 = vpack.c.b16 %v635, %v634
    %v709 = vpack.c.b16 %v637, %v636
    %v710 = vpack.c.b16 %v639, %v638
    %v711 = vpack.c.b16 %v641, %v640
    %v712 = vpack.c.b16 %v643, %v642
    %v713 = vpack.c.b16 %v645, %v644
    %v714 = vpack.c.b16 %v647, %v646
    %v715 = vpack.c.b16 %v649, %v648
    %v716 = vpack.c.b16 %v651, %v650
    %v717 = vpack.c.b16 %v653, %v652
    %782 = vmatprep.subr.bf16.mxu0 0
    %783 = vmatpush1.bf16.msra.mxu0 %v654
    %784 = vmatprep.subr.bf16.mxu0 0
    %785 = vmatpush1.bf16.msra.mxu0 %v655
    %786 = vmatprep.subr.bf16.mxu0 0
    %787 = vmatpush1.bf16.msra.mxu0 %v656
    %788 = vmatprep.subr.bf16.mxu0 0
    %789 = vmatpush1.bf16.msra.mxu0 %v657
    %790 = vmatprep.subr.bf16.mxu0 0
    %791 = vmatpush1.bf16.msra.mxu0 %v658
    %792 = vmatprep.subr.bf16.mxu0 0
    %793 = vmatpush1.bf16.msra.mxu0 %v659
    %794 = vmatprep.subr.bf16.mxu0 0
    %795 = vmatpush1.bf16.msra.mxu0 %v660
    %796 = vmatprep.subr.bf16.mxu0 0
    %797 = vmatpush1.bf16.msra.mxu0 %v661
    %798 = vmatprep.subr.bf16.mxu0 0
    %799 = vmatpush1.bf16.msra.mxu0 %v662
    %800 = vmatprep.subr.bf16.mxu0 0
    %801 = vmatpush1.bf16.msra.mxu0 %v663
    %802 = vmatprep.subr.bf16.mxu0 0
    %803 = vmatpush1.bf16.msra.mxu0 %v664
    %804 = vmatprep.subr.bf16.mxu0 0
    %805 = vmatpush1.bf16.msra.mxu0 %v665
    %806 = vmatprep.subr.bf16.mxu0 0
    %807 = vmatpush1.bf16.msra.mxu0 %v666
    %808 = vmatprep.subr.bf16.mxu0 0
    %809 = vmatpush1.bf16.msra.mxu0 %v667
    %810 = vmatprep.subr.bf16.mxu0 0
    %811 = vmatpush1.bf16.msra.mxu0 %v668
    %812 = vmatprep.subr.bf16.mxu0 0
    %813 = vmatpush1.bf16.msra.mxu0 %v669
    %814 = vmatprep.mubr.bf16.mxu0 %v256
    %815 = vmatmul.mubr.bf16.gmra.mrb[0].mxu0 %v255
    %v816 = vpop.f32.mrb[0].mxu0
    %v817 = vadd.f32 %v396, %v816
    %v818 = vpop.f32.mrb[0].mxu0
    %v819 = vpop.f32.mrb[0].mxu0
    %v820 = vadd.f32 %v396, %v819
    %v821 = vpop.f32.mrb[0].mxu0
    %822 = vdwg.mxu0
    %823 = vmatprep.subr.bf16.mxu0 0
    %824 = vmatpush1.bf16.msra.mxu0 %v670
    %825 = vmatprep.subr.bf16.mxu0 0
    %826 = vmatpush1.bf16.msra.mxu0 %v671
    %827 = vmatprep.subr.bf16.mxu0 0
    %828 = vmatpush1.bf16.msra.mxu0 %v672
    %829 = vmatprep.subr.bf16.mxu0 0
    %830 = vmatpush1.bf16.msra.mxu0 %v673
    %831 = vmatprep.subr.bf16.mxu0 0
    %832 = vmatpush1.bf16.msra.mxu0 %v674
    %833 = vmatprep.subr.bf16.mxu0 0
    %834 = vmatpush1.bf16.msra.mxu0 %v675
    %835 = vmatprep.subr.bf16.mxu0 0
    %836 = vmatpush1.bf16.msra.mxu0 %v676
    %837 = vmatprep.subr.bf16.mxu0 0
    %838 = vmatpush1.bf16.msra.mxu0 %v677
    %839 = vmatprep.subr.bf16.mxu0 0
    %840 = vmatpush1.bf16.msra.mxu0 %v678
    %841 = vmatprep.subr.bf16.mxu0 0
    %842 = vmatpush1.bf16.msra.mxu0 %v679
    %843 = vmatprep.subr.bf16.mxu0 0
    %844 = vmatpush1.bf16.msra.mxu0 %v680
    %845 = vmatprep.subr.bf16.mxu0 0
    %846 = vmatpush1.bf16.msra.mxu0 %v681
    %847 = vmatprep.subr.bf16.mxu0 0
    %848 = vmatpush1.bf16.msra.mxu0 %v682
    %849 = vmatprep.subr.bf16.mxu0 0
    %850 = vmatpush1.bf16.msra.mxu0 %v683
    %851 = vmatprep.subr.bf16.mxu0 0
    %852 = vmatpush1.bf16.msra.mxu0 %v684
    %853 = vmatprep.subr.bf16.mxu0 0
    %854 = vmatpush1.bf16.msra.mxu0 %v685
    %855 = vmatprep.mubr.bf16.mxu0 %v258
    %856 = vmatmul.mubr.bf16.gmra.mrb[0].mxu0 %v257
    %v857 = vpop.f32.mrb[0].mxu0
    %v858 = vadd.f32 %v817, %v857
    %v859 = vpop.f32.mrb[0].mxu0
    %v860 = vpop.f32.mrb[0].mxu0
    %v861 = vadd.f32 %v820, %v860
    %v862 = vpop.f32.mrb[0].mxu0
    %863 = vdwg.mxu0
    %864 = vmatprep.subr.bf16.mxu0 0
    %865 = vmatpush1.bf16.msra.mxu0 %v686
    %866 = vmatprep.subr.bf16.mxu0 0
    %867 = vmatpush1.bf16.msra.mxu0 %v687
    %868 = vmatprep.subr.bf16.mxu0 0
    %869 = vmatpush1.bf16.msra.mxu0 %v688
    %870 = vmatprep.subr.bf16.mxu0 0
    %871 = vmatpush1.bf16.msra.mxu0 %v689
    %872 = vmatprep.subr.bf16.mxu0 0
    %873 = vmatpush1.bf16.msra.mxu0 %v690
    %874 = vmatprep.subr.bf16.mxu0 0
    %875 = vmatpush1.bf16.msra.mxu0 %v691
    %876 = vmatprep.subr.bf16.mxu0 0
    %877 = vmatpush1.bf16.msra.mxu0 %v692
    %878 = vmatprep.subr.bf16.mxu0 0
    %879 = vmatpush1.bf16.msra.mxu0 %v693
    %880 = vmatprep.subr.bf16.mxu0 0
    %881 = vmatpush1.bf16.msra.mxu0 %v694
    %882 = vmatprep.subr.bf16.mxu0 0
    %883 = vmatpush1.bf16.msra.mxu0 %v695
    %884 = vmatprep.subr.bf16.mxu0 0
    %885 = vmatpush1.bf16.msra.mxu0 %v696
    %886 = vmatprep.subr.bf16.mxu0 0
    %887 = vmatpush1.bf16.msra.mxu0 %v697
    %888 = vmatprep.subr.bf16.mxu0 0
    %889 = vmatpush1.bf16.msra.mxu0 %v698
    %890 = vmatprep.subr.bf16.mxu0 0
    %891 = vmatpush1.bf16.msra.mxu0 %v699
    %892 = vmatprep.subr.bf16.mxu0 0
    %893 = vmatpush1.bf16.msra.mxu0 %v700
    %894 = vmatprep.subr.bf16.mxu0 0
    %895 = vmatpush1.bf16.msra.mxu0 %v701
    %896 = vmatprep.mubr.bf16.mxu0 %v260
    %897 = vmatmul.mubr.bf16.gmra.mrb[0].mxu0 %v259
    %v898 = vpop.f32.mrb[0].mxu0
    %v899 = vadd.f32 %v858, %v898
    %v900 = vpop.f32.mrb[0].mxu0
    %v901 = vpop.f32.mrb[0].mxu0
    %v902 = vadd.f32 %v861, %v901
    %v903 = vpop.f32.mrb[0].mxu0
    %904 = vdwg.mxu0
    %905 = vmatprep.subr.bf16.mxu0 0
    %906 = vmatpush1.bf16.msra.mxu0 %v702
    %907 = vmatprep.subr.bf16.mxu0 0
    %908 = vmatpush1.bf16.msra.mxu0 %v703
    %909 = vmatprep.subr.bf16.mxu0 0
    %910 = vmatpush1.bf16.msra.mxu0 %v704
    %911 = vmatprep.subr.bf16.mxu0 0
    %912 = vmatpush1.bf16.msra.mxu0 %v705
    %913 = vmatprep.subr.bf16.mxu0 0
    %914 = vmatpush1.bf16.msra.mxu0 %v706
    %915 = vmatprep.subr.bf16.mxu0 0
    %916 = vmatpush1.bf16.msra.mxu0 %v707
    %917 = vmatprep.subr.bf16.mxu0 0
    %918 = vmatpush1.bf16.msra.mxu0 %v708
    %919 = vmatprep.subr.bf16.mxu0 0
    %920 = vmatpush1.bf16.msra.mxu0 %v709
    %921 = vmatprep.subr.bf16.mxu0 0
    %922 = vmatpush1.bf16.msra.mxu0 %v710
    %923 = vmatprep.subr.bf16.mxu0 0
    %924 = vmatpush1.bf16.msra.mxu0 %v711
    %925 = vmatprep.subr.bf16.mxu0 0
    %926 = vmatpush1.bf16.msra.mxu0 %v712
    %927 = vmatprep.subr.bf16.mxu0 0
    %928 = vmatpush1.bf16.msra.mxu0 %v713
    %929 = vmatprep.subr.bf16.mxu0 0
    %930 = vmatpush1.bf16.msra.mxu0 %v714
    %931 = vmatprep.subr.bf16.mxu0 0
    %932 = vmatpush1.bf16.msra.mxu0 %v715
    %933 = vmatprep.subr.bf16.mxu0 0
    %934 = vmatpush1.bf16.msra.mxu0 %v716
    %935 = vmatprep.subr.bf16.mxu0 0
    %936 = vmatpush1.bf16.msra.mxu0 %v717
    %937 = vmatprep.mubr.bf16.mxu0 %v262
    %938 = vmatmul.mubr.bf16.gmra.mrb[0].mxu0 %v261
    %v939 = vpop.f32.mrb[0].mxu0
    %v940 = vadd.f32 %v899, %v939
    %v941 = vpop.f32.mrb[0].mxu0
    %v942 = vpop.f32.mrb[0].mxu0
    %v943 = vadd.f32 %v902, %v942
    %v944 = vpop.f32.mrb[0].mxu0
    %945 = vdwg.mxu0
    %v946 = vmax.f32 %v940, 0.0
    %v947 = vmax.f32 %v943, 0.0
    %v948 = vpack.c.bf16 %v947, %v946
    %v949 = vld [vmem:[#allocation7] sm:$0xff]
    %v950 = vld [vmem:[#allocation7 + $0x8] sm:$0xff]
    %v951 = vld [vmem:[#allocation7 + $0x10] sm:$0xff]
    %v952 = vld [vmem:[#allocation7 + $0x18] sm:$0xff]
    %v953 = vld [vmem:[#allocation7 + $0x20] sm:$0xff]
    %v954 = vld [vmem:[#allocation7 + $0x28] sm:$0xff]
    %v955 = vld [vmem:[#allocation7 + $0x30] sm:$0xff]
    %v956 = vld [vmem:[#allocation7 + $0x38] sm:$0xff]
    %v957 = vld [vmem:[#allocation7 + $0x40] sm:$0xff]
    %v958 = vld [vmem:[#allocation7 + $0x48] sm:$0xff]
    %v959 = vld [vmem:[#allocation7 + $0x50] sm:$0xff]
    %v960 = vld [vmem:[#allocation7 + $0x58] sm:$0xff]
    %v961 = vld [vmem:[#allocation7 + $0x60] sm:$0xff]
    %v962 = vld [vmem:[#allocation7 + $0x68] sm:$0xff]
    %v963 = vld [vmem:[#allocation7 + $0x70] sm:$0xff]
    %v964 = vld [vmem:[#allocation7 + $0x78] sm:$0xff]
    %v965 = vld [vmem:[#allocation7 + $0x80] sm:$0xff]
    %v966 = vld [vmem:[#allocation7 + $0x88] sm:$0xff]
    %v967 = vld [vmem:[#allocation7 + $0x90] sm:$0xff]
    %v968 = vld [vmem:[#allocation7 + $0x98] sm:$0xff]
    %v969 = vld [vmem:[#allocation7 + $0xa0] sm:$0xff]
    %v970 = vld [vmem:[#allocation7 + $0xa8] sm:$0xff]
    %v971 = vld [vmem:[#allocation7 + $0xb0] sm:$0xff]
    %v972 = vld [vmem:[#allocation7 + $0xb8] sm:$0xff]
    %v973 = vld [vmem:[#allocation7 + $0xc0] sm:$0xff]
    %v974 = vld [vmem:[#allocation7 + $0xc8] sm:$0xff]
    %v975 = vld [vmem:[#allocation7 + $0xd0] sm:$0xff]
    %v976 = vld [vmem:[#allocation7 + $0xd8] sm:$0xff]
    %v977 = vld [vmem:[#allocation7 + $0xe0] sm:$0xff]
    %v978 = vld [vmem:[#allocation7 + $0xe8] sm:$0xff]
    %v979 = vld [vmem:[#allocation7 + $0xf0] sm:$0xff]
    %v980 = vld [vmem:[#allocation7 + $0xf8] sm:$0xff]
    %v981 = vld [vmem:[#allocation7 + $0x100] sm:$0xff]
    %v982 = vld [vmem:[#allocation7 + $0x108] sm:$0xff]
    %v983 = vld [vmem:[#allocation7 + $0x110] sm:$0xff]
    %v984 = vld [vmem:[#allocation7 + $0x118] sm:$0xff]
    %v985 = vld [vmem:[#allocation7 + $0x120] sm:$0xff]
    %v986 = vld [vmem:[#allocation7 + $0x128] sm:$0xff]
    %v987 = vld [vmem:[#allocation7 + $0x130] sm:$0xff]
    %v988 = vld [vmem:[#allocation7 + $0x138] sm:$0xff]
    %v989 = vld [vmem:[#allocation7 + $0x140] sm:$0xff]
    %v990 = vld [vmem:[#allocation7 + $0x148] sm:$0xff]
    %v991 = vld [vmem:[#allocation7 + $0x150] sm:$0xff]
    %v992 = vld [vmem:[#allocation7 + $0x158] sm:$0xff]
    %v993 = vld [vmem:[#allocation7 + $0x160] sm:$0xff]
    %v994 = vld [vmem:[#allocation7 + $0x168] sm:$0xff]
    %v995 = vld [vmem:[#allocation7 + $0x170] sm:$0xff]
    %v996 = vld [vmem:[#allocation7 + $0x178] sm:$0xff]
    %v997 = vld [vmem:[#allocation7 + $0x180] sm:$0xff]
    %v998 = vld [vmem:[#allocation7 + $0x188] sm:$0xff]
    %v999 = vld [vmem:[#allocation7 + $0x190] sm:$0xff]
    %v1000 = vld [vmem:[#allocation7 + $0x198] sm:$0xff]
    %v1001 = vld [vmem:[#allocation7 + $0x1a0] sm:$0xff]
    %v1002 = vld [vmem:[#allocation7 + $0x1a8] sm:$0xff]
    %v1003 = vld [vmem:[#allocation7 + $0x1b0] sm:$0xff]
    %v1004 = vld [vmem:[#allocation7 + $0x1b8] sm:$0xff]
    %v1005 = vld [vmem:[#allocation7 + $0x1c0] sm:$0xff]
    %v1006 = vld [vmem:[#allocation7 + $0x1c8] sm:$0xff]
    %v1007 = vld [vmem:[#allocation7 + $0x1d0] sm:$0xff]
    %v1008 = vld [vmem:[#allocation7 + $0x1d8] sm:$0xff]
    %v1009 = vld [vmem:[#allocation7 + $0x1e0] sm:$0xff]
    %v1010 = vld [vmem:[#allocation7 + $0x1e8] sm:$0xff]
    %v1011 = vld [vmem:[#allocation7 + $0x1f0] sm:$0xff]
    %v1012 = vld [vmem:[#allocation7 + $0x1f8] sm:$0xff]
    %v1013 = vld [vmem:[%s4] sm:$0xff]
    %v1015 = vlaneseq
    %v1016 = vshrl.u32 %v1015, 7
    %v1017 = vsub.s32 0, %v1016
    %v1018 = vrot.slane %v1013, %v1017
    %v1019 = vlaneseq
    %v1020 = vshrl.u32 %v1019, 7
    %v1021 = vsub.s32 1, %v1020
    %v1022 = vrot.slane %v1013, %v1021
    %v1023 = vlaneseq
    %v1024 = vshrl.u32 %v1023, 7
    %v1025 = vsub.s32 2, %v1024
    %v1026 = vrot.slane %v1013, %v1025
    %v1027 = vlaneseq
    %v1028 = vshrl.u32 %v1027, 7
    %v1029 = vsub.s32 3, %v1028
    %v1030 = vrot.slane %v1013, %v1029
    %v1031 = vlaneseq
    %v1032 = vshrl.u32 %v1031, 7
    %v1033 = vsub.s32 4, %v1032
    %v1034 = vrot.slane %v1013, %v1033
    %v1035 = vlaneseq
    %v1036 = vshrl.u32 %v1035, 7
    %v1037 = vsub.s32 5, %v1036
    %v1038 = vrot.slane %v1013, %v1037
    %v1039 = vlaneseq
    %v1040 = vshrl.u32 %v1039, 7
    %v1041 = vsub.s32 6, %v1040
    %v1042 = vrot.slane %v1013, %v1041
    %v1043 = vlaneseq
    %v1044 = vshrl.u32 %v1043, 7
    %v1045 = vsub.s32 7, %v1044
    %v1046 = vrot.slane %v1013, %v1045
    %v1119 = vunpack.c.l.b16 %v949
    %v1120 = vunpack.c.h.b16 %v949
    %v1121 = vunpack.c.l.b16 %v950
    %v1122 = vunpack.c.h.b16 %v950
    %v1123 = vunpack.c.l.b16 %v951
    %v1124 = vunpack.c.h.b16 %v951
    %v1125 = vunpack.c.l.b16 %v952
    %v1126 = vunpack.c.h.b16 %v952
    %v1127 = vunpack.c.l.b16 %v953
    %v1128 = vunpack.c.h.b16 %v953
    %v1129 = vunpack.c.l.b16 %v954
    %v1130 = vunpack.c.h.b16 %v954
    %v1131 = vunpack.c.l.b16 %v955
    %v1132 = vunpack.c.h.b16 %v955
    %v1133 = vunpack.c.l.b16 %v956
    %v1134 = vunpack.c.h.b16 %v956
    %v1135 = vunpack.c.l.b16 %v957
    %v1136 = vunpack.c.h.b16 %v957
    %v1137 = vunpack.c.l.b16 %v958
    %v1138 = vunpack.c.h.b16 %v958
    %v1139 = vunpack.c.l.b16 %v959
    %v1140 = vunpack.c.h.b16 %v959
    %v1141 = vunpack.c.l.b16 %v960
    %v1142 = vunpack.c.h.b16 %v960
    %v1143 = vunpack.c.l.b16 %v961
    %v1144 = vunpack.c.h.b16 %v961
    %v1145 = vunpack.c.l.b16 %v962
    %v1146 = vunpack.c.h.b16 %v962
    %v1147 = vunpack.c.l.b16 %v963
    %v1148 = vunpack.c.h.b16 %v963
    %v1149 = vunpack.c.l.b16 %v964
    %v1150 = vunpack.c.h.b16 %v964
    %v1151 = vunpack.c.l.b16 %v965
    %v1152 = vunpack.c.h.b16 %v965
    %v1153 = vunpack.c.l.b16 %v966
    %v1154 = vunpack.c.h.b16 %v966
    %v1155 = vunpack.c.l.b16 %v967
    %v1156 = vunpack.c.h.b16 %v967
    %v1157 = vunpack.c.l.b16 %v968
    %v1158 = vunpack.c.h.b16 %v968
    %v1159 = vunpack.c.l.b16 %v969
    %v1160 = vunpack.c.h.b16 %v969
    %v1161 = vunpack.c.l.b16 %v970
    %v1162 = vunpack.c.h.b16 %v970
    %v1163 = vunpack.c.l.b16 %v971
    %v1164 = vunpack.c.h.b16 %v971
    %v1165 = vunpack.c.l.b16 %v972
    %v1166 = vunpack.c.h.b16 %v972
    %v1167 = vunpack.c.l.b16 %v973
    %v1168 = vunpack.c.h.b16 %v973
    %v1169 = vunpack.c.l.b16 %v974
    %v1170 = vunpack.c.h.b16 %v974
    %v1171 = vunpack.c.l.b16 %v975
    %v1172 = vunpack.c.h.b16 %v975
    %v1173 = vunpack.c.l.b16 %v976
    %v1174 = vunpack.c.h.b16 %v976
    %v1175 = vunpack.c.l.b16 %v977
    %v1176 = vunpack.c.h.b16 %v977
    %v1177 = vunpack.c.l.b16 %v978
    %v1178 = vunpack.c.h.b16 %v978
    %v1179 = vunpack.c.l.b16 %v979
    %v1180 = vunpack.c.h.b16 %v979
    %v1181 = vunpack.c.l.b16 %v980
    %v1182 = vunpack.c.h.b16 %v980
    %v1183 = vunpack.c.l.b16 %v981
    %v1184 = vunpack.c.h.b16 %v981
    %v1185 = vunpack.c.l.b16 %v982
    %v1186 = vunpack.c.h.b16 %v982
    %v1187 = vunpack.c.l.b16 %v983
    %v1188 = vunpack.c.h.b16 %v983
    %v1189 = vunpack.c.l.b16 %v984
    %v1190 = vunpack.c.h.b16 %v984
    %v1191 = vunpack.c.l.b16 %v985
    %v1192 = vunpack.c.h.b16 %v985
    %v1193 = vunpack.c.l.b16 %v986
    %v1194 = vunpack.c.h.b16 %v986
    %v1195 = vunpack.c.l.b16 %v987
    %v1196 = vunpack.c.h.b16 %v987
    %v1197 = vunpack.c.l.b16 %v988
    %v1198 = vunpack.c.h.b16 %v988
    %v1199 = vunpack.c.l.b16 %v989
    %v1200 = vunpack.c.h.b16 %v989
    %v1201 = vunpack.c.l.b16 %v990
    %v1202 = vunpack.c.h.b16 %v990
    %v1203 = vunpack.c.l.b16 %v991
    %v1204 = vunpack.c.h.b16 %v991
    %v1205 = vunpack.c.l.b16 %v992
    %v1206 = vunpack.c.h.b16 %v992
    %v1207 = vunpack.c.l.b16 %v993
    %v1208 = vunpack.c.h.b16 %v993
    %v1209 = vunpack.c.l.b16 %v994
    %v1210 = vunpack.c.h.b16 %v994
    %v1211 = vunpack.c.l.b16 %v995
    %v1212 = vunpack.c.h.b16 %v995
    %v1213 = vunpack.c.l.b16 %v996
    %v1214 = vunpack.c.h.b16 %v996
    %v1215 = vunpack.c.l.b16 %v997
    %v1216 = vunpack.c.h.b16 %v997
    %v1217 = vunpack.c.l.b16 %v998
    %v1218 = vunpack.c.h.b16 %v998
    %v1219 = vunpack.c.l.b16 %v999
    %v1220 = vunpack.c.h.b16 %v999
    %v1221 = vunpack.c.l.b16 %v1000
    %v1222 = vunpack.c.h.b16 %v1000
    %v1223 = vunpack.c.l.b16 %v1001
    %v1224 = vunpack.c.h.b16 %v1001
    %v1225 = vunpack.c.l.b16 %v1002
    %v1226 = vunpack.c.h.b16 %v1002
    %v1227 = vunpack.c.l.b16 %v1003
    %v1228 = vunpack.c.h.b16 %v1003
    %v1229 = vunpack.c.l.b16 %v1004
    %v1230 = vunpack.c.h.b16 %v1004
    %v1231 = vunpack.c.l.b16 %v1005
    %v1232 = vunpack.c.h.b16 %v1005
    %v1233 = vunpack.c.l.b16 %v1006
    %v1234 = vunpack.c.h.b16 %v1006
    %v1235 = vunpack.c.l.b16 %v1007
    %v1236 = vunpack.c.h.b16 %v1007
    %v1237 = vunpack.c.l.b16 %v1008
    %v1238 = vunpack.c.h.b16 %v1008
    %v1239 = vunpack.c.l.b16 %v1009
    %v1240 = vunpack.c.h.b16 %v1009
    %v1241 = vunpack.c.l.b16 %v1010
    %v1242 = vunpack.c.h.b16 %v1010
    %v1243 = vunpack.c.l.b16 %v1011
    %v1244 = vunpack.c.h.b16 %v1011
    %v1245 = vunpack.c.l.b16 %v1012
    %v1246 = vunpack.c.h.b16 %v1012
    %v1247 = vpack.c.b16 %v1127, %v1119
    %v1248 = vpack.c.b16 %v1128, %v1120
    %v1249 = vpack.c.b16 %v1129, %v1121
    %v1250 = vpack.c.b16 %v1130, %v1122
    %v1251 = vpack.c.b16 %v1131, %v1123
    %v1252 = vpack.c.b16 %v1132, %v1124
    %v1253 = vpack.c.b16 %v1133, %v1125
    %v1254 = vpack.c.b16 %v1134, %v1126
    %v1255 = vpack.c.b16 %v1143, %v1135
    %v1256 = vpack.c.b16 %v1144, %v1136
    %v1257 = vpack.c.b16 %v1145, %v1137
    %v1258 = vpack.c.b16 %v1146, %v1138
    %v1259 = vpack.c.b16 %v1147, %v1139
    %v1260 = vpack.c.b16 %v1148, %v1140
    %v1261 = vpack.c.b16 %v1149, %v1141
    %v1262 = vpack.c.b16 %v1150, %v1142
    %v1263 = vpack.c.b16 %v1159, %v1151
    %v1264 = vpack.c.b16 %v1160, %v1152
    %v1265 = vpack.c.b16 %v1161, %v1153
    %v1266 = vpack.c.b16 %v1162, %v1154
    %v1267 = vpack.c.b16 %v1163, %v1155
    %v1268 = vpack.c.b16 %v1164, %v1156
    %v1269 = vpack.c.b16 %v1165, %v1157
    %v1270 = vpack.c.b16 %v1166, %v1158
    %v1271 = vpack.c.b16 %v1175, %v1167
    %v1272 = vpack.c.b16 %v1176, %v1168
    %v1273 = vpack.c.b16 %v1177, %v1169
    %v1274 = vpack.c.b16 %v1178, %v1170
    %v1275 = vpack.c.b16 %v1179, %v1171
    %v1276 = vpack.c.b16 %v1180, %v1172
    %v1277 = vpack.c.b16 %v1181, %v1173
    %v1278 = vpack.c.b16 %v1182, %v1174
    %v1279 = vpack.c.b16 %v1191, %v1183
    %v1280 = vpack.c.b16 %v1192, %v1184
    %v1281 = vpack.c.b16 %v1193, %v1185
    %v1282 = vpack.c.b16 %v1194, %v1186
    %v1283 = vpack.c.b16 %v1195, %v1187
    %v1284 = vpack.c.b16 %v1196, %v1188
    %v1285 = vpack.c.b16 %v1197, %v1189
    %v1286 = vpack.c.b16 %v1198, %v1190
    %v1287 = vpack.c.b16 %v1207, %v1199
    %v1288 = vpack.c.b16 %v1208, %v1200
    %v1289 = vpack.c.b16 %v1209, %v1201
    %v1290 = vpack.c.b16 %v1210, %v1202
    %v1291 = vpack.c.b16 %v1211, %v1203
    %v1292 = vpack.c.b16 %v1212, %v1204
    %v1293 = vpack.c.b16 %v1213, %v1205
    %v1294 = vpack.c.b16 %v1214, %v1206
    %v1295 = vpack.c.b16 %v1223, %v1215
    %v1296 = vpack.c.b16 %v1224, %v1216
    %v1297 = vpack.c.b16 %v1225, %v1217
    %v1298 = vpack.c.b16 %v1226, %v1218
    %v1299 = vpack.c.b16 %v1227, %v1219
    %v1300 = vpack.c.b16 %v1228, %v1220
    %v1301 = vpack.c.b16 %v1229, %v1221
    %v1302 = vpack.c.b16 %v1230, %v1222
    %v1303 = vpack.c.b16 %v1239, %v1231
    %v1304 = vpack.c.b16 %v1240, %v1232
    %v1305 = vpack.c.b16 %v1241, %v1233
    %v1306 = vpack.c.b16 %v1242, %v1234
    %v1307 = vpack.c.b16 %v1243, %v1235
    %v1308 = vpack.c.b16 %v1244, %v1236
    %v1309 = vpack.c.b16 %v1245, %v1237
    %v1310 = vpack.c.b16 %v1246, %v1238
    %1375 = vmatprep.subr.bf16.mxu0 %v1248
    %1376 = vmatpush1.bf16.msra.mxu0 %v1247
    %1377 = vmatprep.subr.bf16.mxu0 %v1256
    %1378 = vmatpush1.bf16.msra.mxu0 %v1255
    %1379 = vmatprep.subr.bf16.mxu0 %v1264
    %1380 = vmatpush1.bf16.msra.mxu0 %v1263
    %1381 = vmatprep.subr.bf16.mxu0 %v1272
    %1382 = vmatpush1.bf16.msra.mxu0 %v1271
    %1383 = vmatprep.subr.bf16.mxu0 %v1280
    %1384 = vmatpush1.bf16.msra.mxu0 %v1279
    %1385 = vmatprep.subr.bf16.mxu0 %v1288
    %1386 = vmatpush1.bf16.msra.mxu0 %v1287
    %1387 = vmatprep.subr.bf16.mxu0 %v1296
    %1388 = vmatpush1.bf16.msra.mxu0 %v1295
    %1389 = vmatprep.subr.bf16.mxu0 %v1304
    %1390 = vmatpush1.bf16.msra.mxu0 %v1303
    %1391 = vmatprep.subr.bf16.mxu0 0
    %1392 = vmatpush1.bf16.msra.mxu0 0
    %1393 = vmatprep.subr.bf16.mxu0 0
    %1394 = vmatpush1.bf16.msra.mxu0 0
    %1395 = vmatprep.subr.bf16.mxu0 0
    %1396 = vmatpush1.bf16.msra.mxu0 0
    %1397 = vmatprep.subr.bf16.mxu0 0
    %1398 = vmatpush1.bf16.msra.mxu0 0
    %1399 = vmatprep.subr.bf16.mxu0 0
    %1400 = vmatpush1.bf16.msra.mxu0 0
    %1401 = vmatprep.subr.bf16.mxu0 0
    %1402 = vmatpush1.bf16.msra.mxu0 0
    %1403 = vmatprep.subr.bf16.mxu0 0
    %1404 = vmatpush1.bf16.msra.mxu0 0
    %1405 = vmatprep.subr.bf16.mxu0 0
    %1406 = vmatpush1.bf16.msra.mxu0 0
    %1407 = vmatprep.mubr.bf16.mxu0 0
    %1408 = vmatmul.mubr.bf16.gmra.mrb[0].mxu0 %v948
    %v1409 = vpop.f32.mrb[0].mxu0
    %v1410 = vadd.f32 %v1018, %v1409
    %v1411 = vpop.f32.mrb[0].mxu0
    %v1412 = vadd.f32 %v1022, %v1411
    %v1413 = vpop.f32.mrb[0].mxu0
    %v1414 = vadd.f32 %v1018, %v1413
    %v1415 = vpop.f32.mrb[0].mxu0
    %v1416 = vadd.f32 %v1022, %v1415
    %1417 = vdwg.mxu0
    %1418 = vmatprep.subr.bf16.mxu0 %v1250
    %1419 = vmatpush1.bf16.msra.mxu0 %v1249
    %1420 = vmatprep.subr.bf16.mxu0 %v1258
    %1421 = vmatpush1.bf16.msra.mxu0 %v1257
    %1422 = vmatprep.subr.bf16.mxu0 %v1266
    %1423 = vmatpush1.bf16.msra.mxu0 %v1265
    %1424 = vmatprep.subr.bf16.mxu0 %v1274
    %1425 = vmatpush1.bf16.msra.mxu0 %v1273
    %1426 = vmatprep.subr.bf16.mxu0 %v1282
    %1427 = vmatpush1.bf16.msra.mxu0 %v1281
    %1428 = vmatprep.subr.bf16.mxu0 %v1290
    %1429 = vmatpush1.bf16.msra.mxu0 %v1289
    %1430 = vmatprep.subr.bf16.mxu0 %v1298
    %1431 = vmatpush1.bf16.msra.mxu0 %v1297
    %1432 = vmatprep.subr.bf16.mxu0 %v1306
    %1433 = vmatpush1.bf16.msra.mxu0 %v1305
    %1434 = vmatprep.subr.bf16.mxu0 0
    %1435 = vmatpush1.bf16.msra.mxu0 0
    %1436 = vmatprep.subr.bf16.mxu0 0
    %1437 = vmatpush1.bf16.msra.mxu0 0
    %1438 = vmatprep.subr.bf16.mxu0 0
    %1439 = vmatpush1.bf16.msra.mxu0 0
    %1440 = vmatprep.subr.bf16.mxu0 0
    %1441 = vmatpush1.bf16.msra.mxu0 0
    %1442 = vmatprep.subr.bf16.mxu0 0
    %1443 = vmatpush1.bf16.msra.mxu0 0
    %1444 = vmatprep.subr.bf16.mxu0 0
    %1445 = vmatpush1.bf16.msra.mxu0 0
    %1446 = vmatprep.subr.bf16.mxu0 0
    %1447 = vmatpush1.bf16.msra.mxu0 0
    %1448 = vmatprep.subr.bf16.mxu0 0
    %1449 = vmatpush1.bf16.msra.mxu0 0
    %1450 = vmatprep.mubr.bf16.mxu0 0
    %1451 = vmatmul.mubr.bf16.gmra.mrb[0].mxu0 %v948
    %v1452 = vpop.f32.mrb[0].mxu0
    %v1453 = vadd.f32 %v1026, %v1452
    %v1454 = vpop.f32.mrb[0].mxu0
    %v1455 = vadd.f32 %v1030, %v1454
    %v1456 = vpop.f32.mrb[0].mxu0
    %v1457 = vadd.f32 %v1026, %v1456
    %v1458 = vpop.f32.mrb[0].mxu0
    %v1459 = vadd.f32 %v1030, %v1458
    %1460 = vdwg.mxu0
    %1461 = vmatprep.subr.bf16.mxu0 %v1252
    %1462 = vmatpush1.bf16.msra.mxu0 %v1251
    %1463 = vmatprep.subr.bf16.mxu0 %v1260
    %1464 = vmatpush1.bf16.msra.mxu0 %v1259
    %1465 = vmatprep.subr.bf16.mxu0 %v1268
    %1466 = vmatpush1.bf16.msra.mxu0 %v1267
    %1467 = vmatprep.subr.bf16.mxu0 %v1276
    %1468 = vmatpush1.bf16.msra.mxu0 %v1275
    %1469 = vmatprep.subr.bf16.mxu0 %v1284
    %1470 = vmatpush1.bf16.msra.mxu0 %v1283
    %1471 = vmatprep.subr.bf16.mxu0 %v1292
    %1472 = vmatpush1.bf16.msra.mxu0 %v1291
    %1473 = vmatprep.subr.bf16.mxu0 %v1300
    %1474 = vmatpush1.bf16.msra.mxu0 %v1299
    %1475 = vmatprep.subr.bf16.mxu0 %v1308
    %1476 = vmatpush1.bf16.msra.mxu0 %v1307
    %1477 = vmatprep.subr.bf16.mxu0 0
    %1478 = vmatpush1.bf16.msra.mxu0 0
    %1479 = vmatprep.subr.bf16.mxu0 0
    %1480 = vmatpush1.bf16.msra.mxu0 0
    %1481 = vmatprep.subr.bf16.mxu0 0
    %1482 = vmatpush1.bf16.msra.mxu0 0
    %1483 = vmatprep.subr.bf16.mxu0 0
    %1484 = vmatpush1.bf16.msra.mxu0 0
    %1485 = vmatprep.subr.bf16.mxu0 0
    %1486 = vmatpush1.bf16.msra.mxu0 0
    %1487 = vmatprep.subr.bf16.mxu0 0
    %1488 = vmatpush1.bf16.msra.mxu0 0
    %1489 = vmatprep.subr.bf16.mxu0 0
    %1490 = vmatpush1.bf16.msra.mxu0 0
    %1491 = vmatprep.subr.bf16.mxu0 0
    %1492 = vmatpush1.bf16.msra.mxu0 0
    %1493 = vmatprep.mubr.bf16.mxu0 0
    %1494 = vmatmul.mubr.bf16.gmra.mrb[0].mxu0 %v948
    %v1495 = vpop.f32.mrb[0].mxu0
    %v1496 = vadd.f32 %v1034, %v1495
    %v1497 = vpop.f32.mrb[0].mxu0
    %v1498 = vadd.f32 %v1038, %v1497
    %v1499 = vpop.f32.mrb[0].mxu0
    %v1500 = vadd.f32 %v1034, %v1499
    %v1501 = vpop.f32.mrb[0].mxu0
    %v1502 = vadd.f32 %v1038, %v1501
    %1503 = vdwg.mxu0
    %1504 = vmatprep.subr.bf16.mxu0 %v1254
    %1505 = vmatpush1.bf16.msra.mxu0 %v1253
    %1506 = vmatprep.subr.bf16.mxu0 %v1262
    %1507 = vmatpush1.bf16.msra.mxu0 %v1261
    %1508 = vmatprep.subr.bf16.mxu0 %v1270
    %1509 = vmatpush1.bf16.msra.mxu0 %v1269
    %1510 = vmatprep.subr.bf16.mxu0 %v1278
    %1511 = vmatpush1.bf16.msra.mxu0 %v1277
    %1512 = vmatprep.subr.bf16.mxu0 %v1286
    %1513 = vmatpush1.bf16.msra.mxu0 %v1285
    %1514 = vmatprep.subr.bf16.mxu0 %v1294
    %1515 = vmatpush1.bf16.msra.mxu0 %v1293
    %1516 = vmatprep.subr.bf16.mxu0 %v1302
    %1517 = vmatpush1.bf16.msra.mxu0 %v1301
    %1518 = vmatprep.subr.bf16.mxu0 %v1310
    %1519 = vmatpush1.bf16.msra.mxu0 %v1309
    %1520 = vmatprep.subr.bf16.mxu0 0
    %1521 = vmatpush1.bf16.msra.mxu0 0
    %1522 = vmatprep.subr.bf16.mxu0 0
    %1523 = vmatpush1.bf16.msra.mxu0 0
    %1524 = vmatprep.subr.bf16.mxu0 0
    %1525 = vmatpush1.bf16.msra.mxu0 0
    %1526 = vmatprep.subr.bf16.mxu0 0
    %1527 = vmatpush1.bf16.msra.mxu0 0
    %1528 = vmatprep.subr.bf16.mxu0 0
    %1529 = vmatpush1.bf16.msra.mxu0 0
    %1530 = vmatprep.subr.bf16.mxu0 0
    %1531 = vmatpush1.bf16.msra.mxu0 0
    %1532 = vmatprep.subr.bf16.mxu0 0
    %1533 = vmatpush1.bf16.msra.mxu0 0
    %1534 = vmatprep.subr.bf16.mxu0 0
    %1535 = vmatpush1.bf16.msra.mxu0 0
    %1536 = vmatprep.mubr.bf16.mxu0 0
    %1537 = vmatmul.mubr.bf16.gmra.mrb[0].mxu0 %v948
    %v1538 = vpop.f32.mrb[0].mxu0
    %v1539 = vadd.f32 %v1042, %v1538
    %v1540 = vpop.f32.mrb[0].mxu0
    %v1541 = vadd.f32 %v1046, %v1540
    %v1542 = vpop.f32.mrb[0].mxu0
    %v1543 = vadd.f32 %v1042, %v1542
    %v1544 = vpop.f32.mrb[0].mxu0
    %v1545 = vadd.f32 %v1046, %v1544
    %1546 = vdwg.mxu0
    %v1563 = vcombine.low %v1410, %v1412
    %v1564 = vcombine.high %v1410, %v1412
    %v1565 = vcombine.low %v1453, %v1455
    %v1566 = vcombine.high %v1453, %v1455
    %v1568 = vunpack.c.l.s4 1983009808
    %v1569 = vunpack.c.0.s8 %v1568
    %v1570 = vlaneseq
    %v1571 = vshrl.u32 %v1570, 7
    %v1572 = vsub.s32 %v1569, %v1571
    %v1573 = vrot.slane %v1563, %v1572
    %v1575 = vunpack.c.l.s4 1983009808
    %v1576 = vunpack.c.0.s8 %v1575
    %v1577 = vlaneseq
    %v1578 = vshrl.u32 %v1577, 7
    %v1579 = vsub.s32 %v1576, %v1578
    %v1580 = vrot.slane %v1564, %v1579
    %v1582 = vunpack.c.l.s4 1983009808
    %v1583 = vunpack.c.0.s8 %v1582
    %v1584 = vlaneseq
    %v1585 = vshrl.u32 %v1584, 7
    %v1586 = vsub.s32 %v1583, %v1585
    %v1587 = vrot.slane %v1565, %v1586
    %v1589 = vunpack.c.l.s4 1983009808
    %v1590 = vunpack.c.0.s8 %v1589
    %v1591 = vlaneseq
    %v1592 = vshrl.u32 %v1591, 7
    %v1593 = vsub.s32 %v1590, %v1592
    %v1594 = vrot.slane %v1566, %v1593
    %v1595 = vcombine.low %v1573, %v1587
    %v1596 = vcombine.high %v1573, %v1587
    %v1597 = vcombine.low %v1580, %v1594
    %v1598 = vcombine.high %v1580, %v1594
    %v1599 = vcombine.low %v1496, %v1498
    %v1600 = vcombine.high %v1496, %v1498
    %v1601 = vcombine.low %v1539, %v1541
    %v1602 = vcombine.high %v1539, %v1541
    %v1604 = vunpack.c.l.s4 1983009808
    %v1605 = vunpack.c.0.s8 %v1604
    %v1606 = vlaneseq
    %v1607 = vshrl.u32 %v1606, 7
    %v1608 = vsub.s32 %v1605, %v1607
    %v1609 = vrot.slane %v1599, %v1608
    %v1611 = vunpack.c.l.s4 1983009808
    %v1612 = vunpack.c.0.s8 %v1611
    %v1613 = vlaneseq
    %v1614 = vshrl.u32 %v1613, 7
    %v1615 = vsub.s32 %v1612, %v1614
    %v1616 = vrot.slane %v1600, %v1615
    %v1618 = vunpack.c.l.s4 1983009808
    %v1619 = vunpack.c.0.s8 %v1618
    %v1620 = vlaneseq
    %v1621 = vshrl.u32 %v1620, 7
    %v1622 = vsub.s32 %v1619, %v1621
    %v1623 = vrot.slane %v1601, %v1622
    %v1625 = vunpack.c.l.s4 1983009808
    %v1626 = vunpack.c.0.s8 %v1625
    %v1627 = vlaneseq
    %v1628 = vshrl.u32 %v1627, 7
    %v1629 = vsub.s32 %v1626, %v1628
    %v1630 = vrot.slane %v1602, %v1629
    %v1631 = vcombine.low %v1609, %v1623
    %v1632 = vcombine.high %v1609, %v1623
    %v1633 = vcombine.low %v1616, %v1630
    %v1634 = vcombine.high %v1616, %v1630
    %v1635 = vcombine.low %v1414, %v1416
    %v1636 = vcombine.high %v1414, %v1416
    %v1637 = vcombine.low %v1457, %v1459
    %v1638 = vcombine.high %v1457, %v1459
    %v1640 = vunpack.c.l.s4 1983009808
    %v1641 = vunpack.c.0.s8 %v1640
    %v1642 = vlaneseq
    %v1643 = vshrl.u32 %v1642, 7
    %v1644 = vsub.s32 %v1641, %v1643
    %v1645 = vrot.slane %v1635, %v1644
    %v1647 = vunpack.c.l.s4 1983009808
    %v1648 = vunpack.c.0.s8 %v1647
    %v1649 = vlaneseq
    %v1650 = vshrl.u32 %v1649, 7
    %v1651 = vsub.s32 %v1648, %v1650
    %v1652 = vrot.slane %v1636, %v1651
    %v1654 = vunpack.c.l.s4 1983009808
    %v1655 = vunpack.c.0.s8 %v1654
    %v1656 = vlaneseq
    %v1657 = vshrl.u32 %v1656, 7
    %v1658 = vsub.s32 %v1655, %v1657
    %v1659 = vrot.slane %v1637, %v1658
    %v1661 = vunpack.c.l.s4 1983009808
    %v1662 = vunpack.c.0.s8 %v1661
    %v1663 = vlaneseq
    %v1664 = vshrl.u32 %v1663, 7
    %v1665 = vsub.s32 %v1662, %v1664
    %v1666 = vrot.slane %v1638, %v1665
    %v1667 = vcombine.low %v1645, %v1659
    %v1668 = vcombine.high %v1645, %v1659
    %v1669 = vcombine.low %v1652, %v1666
    %v1670 = vcombine.high %v1652, %v1666
    %v1671 = vcombine.low %v1500, %v1502
    %v1672 = vcombine.high %v1500, %v1502
    %v1673 = vcombine.low %v1543, %v1545
    %v1674 = vcombine.high %v1543, %v1545
    %v1676 = vunpack.c.l.s4 1983009808
    %v1677 = vunpack.c.0.s8 %v1676
    %v1678 = vlaneseq
    %v1679 = vshrl.u32 %v1678, 7
    %v1680 = vsub.s32 %v1677, %v1679
    %v1681 = vrot.slane %v1671, %v1680
    %v1683 = vunpack.c.l.s4 1983009808
    %v1684 = vunpack.c.0.s8 %v1683
    %v1685 = vlaneseq
    %v1686 = vshrl.u32 %v1685, 7
    %v1687 = vsub.s32 %v1684, %v1686
    %v1688 = vrot.slane %v1672, %v1687
    %v1690 = vunpack.c.l.s4 1983009808
    %v1691 = vunpack.c.0.s8 %v1690
    %v1692 = vlaneseq
    %v1693 = vshrl.u32 %v1692, 7
    %v1694 = vsub.s32 %v1691, %v1693
    %v1695 = vrot.slane %v1673, %v1694
    %v1697 = vunpack.c.l.s4 1983009808
    %v1698 = vunpack.c.0.s8 %v1697
    %v1699 = vlaneseq
    %v1700 = vshrl.u32 %v1699, 7
    %v1701 = vsub.s32 %v1698, %v1700
    %v1702 = vrot.slane %v1674, %v1701
    %v1703 = vcombine.low %v1681, %v1695
    %v1704 = vcombine.high %v1681, %v1695
    %v1705 = vcombine.low %v1688, %v1702
    %v1706 = vcombine.high %v1688, %v1702
    %1723 = vst [vmem:[#allocation8] sm:$0xff] %v1595
    %1724 = vst [vmem:[#allocation8 + $0x8] sm:$0xff] %v1631
    %1725 = vst [vmem:[#allocation8 + $0x10] sm:$0xff] %v1596
    %1726 = vst [vmem:[#allocation8 + $0x18] sm:$0xff] %v1632
    %1727 = vst [vmem:[#allocation8 + $0x20] sm:$0xff] %v1597
    %1728 = vst [vmem:[#allocation8 + $0x28] sm:$0xff] %v1633
    %1729 = vst [vmem:[#allocation8 + $0x30] sm:$0xff] %v1598
    %1730 = vst [vmem:[#allocation8 + $0x38] sm:$0xff] %v1634
    %1731 = vst [vmem:[#allocation8 + $0x40] sm:$0xff] %v1667
    %1732 = vst [vmem:[#allocation8 + $0x48] sm:$0xff] %v1703
    %1733 = vst [vmem:[#allocation8 + $0x50] sm:$0xff] %v1668
    %1734 = vst [vmem:[#allocation8 + $0x58] sm:$0xff] %v1704
    %1735 = vst [vmem:[#allocation8 + $0x60] sm:$0xff] %v1669
    %1736 = vst [vmem:[#allocation8 + $0x68] sm:$0xff] %v1705
    %1737 = vst [vmem:[#allocation8 + $0x70] sm:$0xff] %v1670
    %1738 = vst [vmem:[#allocation8 + $0x78] sm:$0xff] %v1706
    // Predicated region
    $region34: #{tpu_custom_call.1} parent=1 // pred_check
      _
    $region35: #{tpu_custom_call.1} parent=1 // pred_check_branch
      %1740 = sbr.rel (0) target = $region37
    $region36: #{tpu_custom_call.1} parent=1 // pred_region
      %s1742 = ssub.s32 2048, 256
      %1743 = vsyncadd [#allocation4], %s1742
      %s1744 = sshll.u32 [#allocation8], 4
      %s1745 = int_to_ptr.vmem [resolvable:$true] %s1744
      %1750 = dma.vmem_to_hbm [thread:$0]  %s1745, 256, %s5, [#allocation4], 256, 256, 16
    $region37: #{tpu_custom_call.1} parent=1 // pred_fallthru
      _
    // Predicated region
    $region38: #{tpu_custom_call.1} parent=1 // pred_check
      _
    $region39: #{tpu_custom_call.1} parent=1 // pred_check_branch
      %1752 = sbr.rel (0) target = $region41
    $region40: #{tpu_custom_call.1} parent=1 // pred_region
      %1753 = dma.done [#allocation4], 2048
    $region41: #{tpu_custom_call.1} parent=1 // pred_fallthru
      _
    %1754 = vsyncpa [#allocation3], 1
    %1755 = vsyncpa [#allocation6], 1
    %1756 = vsyncpa [#allocation4], 1

</llo_original>
